<compile_context>
chip_gen: v5e
topology: v5e:2x2
jax: 0.10.0
libtpu: 0.0.40
codegen_flags: <defaults>
</compile_context>

<pallas_src>
import functools

import jax
import jax.numpy as jnp
from jax.experimental import pallas as pl
from jax.experimental.pallas import tpu as pltpu

_EPS = 1e-6  # matches torch.nn.functional.pairwise_distance default eps


def _contrastive_kernel(x1_ref, x2_ref, label_ref, out_ref, *,
                        margin, batch, tile_b, ragged):
    # x1_ref, x2_ref: (TB, D); label_ref: (TB, 1); out_ref: (1, 1, 1) partial sum.
    x1 = x1_ref[...].astype(jnp.float32)
    x2 = x2_ref[...].astype(jnp.float32)
    lab = label_ref[...].astype(jnp.float32)

    diff = x1 - x2 + _EPS
    d2 = jnp.sum(diff * diff, axis=-1, keepdims=True)     # (TB, 1) squared distance
    d = jnp.sqrt(d2)                                       # euclidean distance (EUP)
    hinge = jnp.maximum(margin - d, 0.0)
    per_row = (1.0 - lab) * d2 + lab * (hinge * hinge)     # (TB, 1)

    if ragged:
        # Zero out rows beyond the true batch size (padded last tile).  Only
        # emitted when B is not a multiple of the tile size.
        i = pl.program_id(0)
        row = i * tile_b + jax.lax.broadcasted_iota(jnp.int32, per_row.shape, 0)
        per_row = jnp.where(row < batch, per_row, 0.0)

    # Per-tile partial sum -> single scalar written back per grid step.
    out_ref[0] = jnp.sum(per_row, axis=0, keepdims=True)   # (1, 1) into (1, 1, 1)


def contrastive_loss(output1, output2, label, margin=2.0):
    """Pallas TPU implementation of ContrastiveLoss.forward.

    output1, output2: (B, D) floats (any float dtype; upcast in-kernel)
    label:            (B,)   0/1 labels
    returns scalar float32 loss
    """
    B, D = output1.shape
    label2d = label.reshape(B, 1)

    itemsize = max(jnp.dtype(output1.dtype).itemsize,
                   jnp.dtype(output2.dtype).itemsize)
    lbl_itemsize = jnp.dtype(label.dtype).itemsize

    # Sublane alignment that respects native packing of sub-32-bit dtypes:
    # f32 -> 8, bf16 -> 16, int8/fp8 -> 32.
    align = max(8, 32 // min(itemsize, 4))

    # --- byte-based tile sizing, lane-padding aware -------------------------
    # A (tb, D) VMEM block occupies ceil(D/128)*128 lanes; the (tb, 1) label
    # block pads to 128 lanes as well.  Budget the *padded* footprint.
    d_pad = pl.cdiv(D, 128) * 128
    per_row_vmem_bytes = 2 * d_pad * itemsize + 128 * lbl_itemsize
    tile_budget_bytes = 8 * 1024 * 1024          # one buffer set (x2 for pipelining)
    tb = tile_budget_bytes // per_row_vmem_bytes
    tb = max(align, (tb // align) * align)

    # Keep at least 2 tiles for large batches so the "parallel" grid axis can be
    # sharded across the two v7x TensorCores (neutral on v5e/v6e).
    half_cap = max(align, pl.cdiv(pl.cdiv(B, 2), align) * align)
    tb = min(tb, half_cap)

    num_tiles = pl.cdiv(B, tb)
    ragged = (B % tb) != 0

    kernel = functools.partial(
        _contrastive_kernel, margin=float(margin), batch=B, tile_b=tb,
        ragged=ragged)

    bytes_accessed = (2 * B * D * itemsize + B * lbl_itemsize + num_tiles * 4)
    cost = pl.CostEstimate(flops=4 * B * D, transcendentals=B,
                           bytes_accessed=bytes_accessed)

    partials = pl.pallas_call(
        kernel,
        out_shape=jax.ShapeDtypeStruct((num_tiles, 1, 1), jnp.float32),
        grid=(num_tiles,),
        in_specs=[
            pl.BlockSpec((tb, D), lambda i: (i, 0)),
            pl.BlockSpec((tb, D), lambda i: (i, 0)),
            pl.BlockSpec((tb, 1), lambda i: (i, 0)),
        ],
        out_specs=pl.BlockSpec((1, 1, 1), lambda i: (i, 0, 0)),
        compiler_params=pltpu.CompilerParams(
            dimension_semantics=("parallel",),
            # ~16 MiB double-buffered working set; raise scoped VMEM so the same
            # tiling fits on v5e (16 MiB default) while staying under v7x's
            # 64 MiB physical VMEM.
            vmem_limit_bytes=40 * 1024 * 1024,
        ),
        cost_estimate=cost,
    )(output1, output2, label2d)

    # Sum the num_tiles partial sums; divide by the true batch size once.
    return jnp.sum(partials) / B


def _reference(output1, output2, label, margin=2.0):
    # Pure-JAX reference mirroring the PyTorch module exactly.
    o1 = output1.astype(jnp.float32)
    o2 = output2.astype(jnp.float32)
    lab = label.astype(jnp.float32)
    d = jnp.sqrt(jnp.sum(jnp.square(o1 - o2 + _EPS), axis=-1))
    return jnp.mean((1.0 - lab) * d**2
                    + lab * jnp.square(jnp.maximum(margin - d, 0.0)))


if __name__ == "__main__":
    key = jax.random.PRNGKey(0)
    k1, k2, k3 = jax.random.split(key, 3)

    # Small shapes consistent with the module: (B, D) feature vectors + (B,) labels.
    B, D = 8, 32
    output1 = jax.random.normal(k1, (B, D), dtype=jnp.float32)
    output2 = jax.random.normal(k2, (B, D), dtype=jnp.float32)
    label = jax.random.bernoulli(k3, 0.5, (B,)).astype(jnp.float32)

    loss = contrastive_loss(output1, output2, label, margin=2.0)
    loss = jax.block_until_ready(loss)
    ref = _reference(output1, output2, label, margin=2.0)
    assert jnp.allclose(loss, ref, rtol=1e-5, atol=1e-5), (loss, ref)

    # Ragged-batch check (B not a multiple of the tile): exercises the
    # multi-tile path + in-kernel padding mask + partial-sum accumulation.
    B2 = 13
    k4, k5, k6 = jax.random.split(jax.random.PRNGKey(1), 3)
    o1b = jax.random.normal(k4, (B2, D), dtype=jnp.float32)
    o2b = jax.random.normal(k5, (B2, D), dtype=jnp.float32)
    labb = jax.random.bernoulli(k6, 0.5, (B2,)).astype(jnp.float32)
    loss2 = jax.block_until_ready(contrastive_loss(o1b, o2b, labb, margin=2.0))
    ref2 = _reference(o1b, o2b, labb, margin=2.0)
    assert jnp.allclose(loss2, ref2, rtol=1e-5, atol=1e-5), (loss2, ref2)

    print("KERNEL_OK")
</pallas_src>

<mosaic_0001>
module attributes {stable_mosaic.version = 11 : i64} {
  func.func @_contrastive_kernel(%arg0: i32, %arg1: memref<8x32xf32, #tpu.memory_space<vmem>>, %arg2: memref<8x32xf32, #tpu.memory_space<vmem>>, %arg3: memref<8x1xf32, #tpu.memory_space<vmem>>, %arg4: memref<1x1x1xf32, #tpu.memory_space<vmem>>) attributes {dimension_semantics = [#tpu.dimension_semantics<parallel>], iteration_bounds = array<i64: 1>, scalar_prefetch = 0 : i64, scratch_operands = 0 : i64, tpu.core_type = #tpu.core_type<tc>, window_params = [{transform_indices = @transform_0, window_bounds = array<i64: 8, 32>}, {transform_indices = @transform_1, window_bounds = array<i64: 8, 32>}, {transform_indices = @transform_2, window_bounds = array<i64: 8, 1>}, {transform_indices = @transform_3, window_bounds = array<i64: 1, 1, 1>}]} {
    %c0 = arith.constant 0 : index
    %c0_0 = arith.constant 0 : index
    %0 = vector.load %arg1[%c0, %c0_0] : memref<8x32xf32, #tpu.memory_space<vmem>>, vector<8x32xf32>
    %c0_1 = arith.constant 0 : index
    %c0_2 = arith.constant 0 : index
    %1 = vector.load %arg2[%c0_1, %c0_2] : memref<8x32xf32, #tpu.memory_space<vmem>>, vector<8x32xf32>
    %c0_3 = arith.constant 0 : index
    %c0_4 = arith.constant 0 : index
    %2 = vector.load %arg3[%c0_3, %c0_4] : memref<8x1xf32, #tpu.memory_space<vmem>>, vector<8x1xf32>
    %3 = arith.subf %0, %1 : vector<8x32xf32>
    %cst = arith.constant 9.99999997E-7 : f32
    %4 = vector.broadcast %cst : f32 to vector<8x32xf32>
    %5 = arith.addf %3, %4 : vector<8x32xf32>
    %6 = arith.mulf %5, %5 : vector<8x32xf32>
    %cst_5 = arith.constant dense<0.000000e+00> : vector<8xf32>
    %7 = vector.multi_reduction <add>, %6, %cst_5 [1] : vector<8x32xf32> to vector<8xf32>
    %8 = vector.shape_cast %7 : vector<8xf32> to vector<8x1xf32>
    %9 = math.sqrt %8 : vector<8x1xf32>
    %cst_6 = arith.constant 2.000000e+00 : f32
    %10 = vector.broadcast %cst_6 : f32 to vector<8x1xf32>
    %11 = arith.subf %10, %9 : vector<8x1xf32>
    %cst_7 = arith.constant 0.000000e+00 : f32
    %12 = vector.broadcast %cst_7 : f32 to vector<8x1xf32>
    %13 = arith.maximumf %11, %12 : vector<8x1xf32>
    %cst_8 = arith.constant 1.000000e+00 : f32
    %14 = vector.broadcast %cst_8 : f32 to vector<8x1xf32>
    %15 = arith.subf %14, %2 : vector<8x1xf32>
    %16 = arith.mulf %15, %8 : vector<8x1xf32>
    %17 = arith.mulf %13, %13 : vector<8x1xf32>
    %18 = arith.mulf %2, %17 : vector<8x1xf32>
    %19 = arith.addf %16, %18 : vector<8x1xf32>
    %cst_9 = arith.constant dense<0.000000e+00> : vector<1xf32>
    %20 = vector.multi_reduction <add>, %19, %cst_9 [0] : vector<8x1xf32> to vector<1xf32>
    %21 = vector.shape_cast %20 : vector<1xf32> to vector<1x1xf32>
    %c0_10 = arith.constant 0 : index
    %c0_11 = arith.constant 0 : index
    %c0_12 = arith.constant 0 : index
    %22 = vector.load %arg4[%c0_10, %c0_11, %c0_12] : memref<1x1x1xf32, #tpu.memory_space<vmem>>, vector<1x1x1xf32>
    %23 = vector.shape_cast %22 : vector<1x1x1xf32> to vector<1x1xf32>
    %24 = vector.shape_cast %21 : vector<1x1xf32> to vector<1x1x1xf32>
    tpu.vector_store %arg4[%c0_10, %c0_11, %c0_12], %24 {strides = array<i32>} : memref<1x1x1xf32, #tpu.memory_space<vmem>>, vector<1x1x1xf32>,
    return
  }
  func.func @transform_0(%arg0: i32) -> (i32, i32) {
    %c0_i32 = arith.constant 0 : i32
    %c0_i32_0 = arith.constant 0 : i32
    return %arg0, %c0_i32 : i32, i32
  }
  func.func @transform_1(%arg0: i32) -> (i32, i32) {
    %c0_i32 = arith.constant 0 : i32
    %c0_i32_0 = arith.constant 0 : i32
    return %arg0, %c0_i32 : i32, i32
  }
  func.func @transform_2(%arg0: i32) -> (i32, i32) {
    %c0_i32 = arith.constant 0 : i32
    %c0_i32_0 = arith.constant 0 : i32
    return %arg0, %c0_i32 : i32, i32
  }
  func.func @transform_3(%arg0: i32) -> (i32, i32, i32) {
    %c0_i32 = arith.constant 0 : i32
    %c0_i32_0 = arith.constant 0 : i32
    %c0_i32_1 = arith.constant 0 : i32
    return %arg0, %c0_i32, %c0_i32_0 : i32, i32, i32
  }
}

</mosaic_0001>

<llo_original>
// kernel: tpu_custom_call.1
$region0: #{tpu_custom_call.1}
  #allocation0 [shape = 'u32[]', space=smem, size = 0x4, offset = 0x4, fixed_abs, tag = 'smem constant byte address 0x4 - core index']
  #allocation1 [shape = 'u32[72,128]{1,0:T(1,128)}', space=vmem, size = 0x9000, scoped, tag = 'internal scratch']
  %s0 = inlined_call_operand.vmem [shape: f32[8,32], index: 0, kind: input, shape index: {}]
  %s1 = inlined_call_operand.hbm [shape: f32[8,32], index: 1, kind: input, shape index: {}]
  %s2 = inlined_call_operand.vmem [shape: f32[8,1], index: 2, kind: input, shape index: {}]
  %s3 = inlined_call_operand.hbm [shape: f32[1,1,1], index: 3, kind: output, shape index: {}]
  %s4 = sld [smem:[#allocation0]]
  $region26: #{tpu_custom_call.1} parent=0
    _
  %s6 = ssub.s32 1, %s4
  %s7 = scalar_select 0, %s6, %s4
  $region1: #{tpu_custom_call.1} parent=0
    #allocation2 [shape = 'u8[4096]{0}', space=vmem, size = 0x1000, scoped, tag = 'input window, operand 1, single buffered']
    #allocation3 [shape = 's32[1]{0}', space=sflag, size = 0x4, scoped, tag = 'scoped memory for tpu_custom_call.1']
    #allocation4 [shape = 's32[1]{0}', space=sflag, size = 0x4, scoped, tag = 'scoped memory for tpu_custom_call.1']
    #allocation5 [shape = 'u8[512]{0}', space=vmem, size = 0x400, scoped, tag = 'output window, operand 0, single buffered']
    %8 = vsyncpa [#allocation3], 0
    %9 = vsyncpa [#allocation4], 0
    // Predicated region
    $region2: #{tpu_custom_call.1} parent=1 // pred_check
      _
    $region3: #{tpu_custom_call.1} parent=1 // pred_check_branch
      %11 = sbr.rel (0) target = $region5
    $region4: #{tpu_custom_call.1} parent=1 // pred_region
      _
    $region5: #{tpu_custom_call.1} parent=1 // pred_fallthru
      _
    // Predicated region
    $region6: #{tpu_custom_call.1} parent=1 // pred_check
      _
    $region7: #{tpu_custom_call.1} parent=1 // pred_check_branch
      %13 = sbr.rel (0) target = $region9
    $region8: #{tpu_custom_call.1} parent=1 // pred_region
      %15 = vsyncadd [#allocation3], 0
      %s17 = sshll.u32 %s1, 4
      %s18 = int_to_ptr.hbm [resolvable:$true] %s17
      %s19 = sshll.u32 [#allocation2], 4
      %s20 = int_to_ptr.vmem [resolvable:$true] %s19
      %22 = dma.hbm_to_vmem [thread:$0]  %s18, 128, %s20, [#allocation3]
    $region9: #{tpu_custom_call.1} parent=1 // pred_fallthru
      _
    // Predicated region
    $region10: #{tpu_custom_call.1} parent=1 // pred_check
      _
    $region11: #{tpu_custom_call.1} parent=1 // pred_check_branch
      %24 = sbr.rel (0) target = $region13
    $region12: #{tpu_custom_call.1} parent=1 // pred_region
      _
    $region13: #{tpu_custom_call.1} parent=1 // pred_fallthru
      _
    // Predicated region
    $region14: #{tpu_custom_call.1} parent=1 // pred_check
      _
    $region15: #{tpu_custom_call.1} parent=1 // pred_check_branch
      %26 = sbr.rel (0) target = $region17
    $region16: #{tpu_custom_call.1} parent=1 // pred_region
      %28 = dma.done [#allocation3], 128
    $region17: #{tpu_custom_call.1} parent=1 // pred_fallthru
      _
    %v29 = vld [vmem:[%s0] sm:$0xff]
    %v30 = vld [vmem:[#allocation2] sm:$0xff]
    %v31 = vld [vmem:[%s2] sm:$0xff]
    %v32 = vsub.f32 %v29, %v30
    %v33 = vadd.f32 %v32, 1e-06
    %v34 = vmul.f32 %v33, %v33
    %vm35 = vcmask 261120
    %v36 = vsel %vm35, %v34, 0.0
    %37 = vadd.xlane.f32.xlu0 %v36
    %v38 = vpop.xlane.xlu0 %37
    %v39 = vrsqrt.pop %v38
    %v40 = vmul.f32 %v39, %v38
    %v41 = vmul.f32 %v40, %v39
    %v42 = vmul.f32 0.5, %v41
    %v43 = vsub.f32 1.5, %v42
    %v44 = vmul.f32 %v39, %v43
    %v45 = vmul.f32 %v38, %v44
    %vm46 = vcmp.eq.f32.partialorder %v38, inf
    %v47 = vsel %vm46, %v38, %v45
    %vm48 = vcmp.eq.f32.partialorder %v38, 0.0
    %v49 = vand.u32 %v38, 2147483648
    %v50 = vsel %vm48, %v49, %v47
    %v51 = vsub.f32 2.0, %v50
    %v52 = vmax.f32 %v51, 0.0
    %v53 = vsub.f32 1.0, %v31
    %v54 = vmul.f32 %v53, %v38
    %v55 = vmul.f32 %v52, %v52
    %v56 = vmul.f32 %v31, %v55
    %v57 = vadd.f32 %v54, %v56
    %vm58 = vcmask 7168
    %v59 = vsel %vm58, %v57, 0.0
    %v60 = vrot.slane %v59, 4
    %v61 = vadd.f32 %v59, %v60
    %v62 = vrot.slane %v61, 2
    %v63 = vadd.f32 %v61, %v62
    %v64 = vrot.slane %v63, 1
    %v65 = vadd.f32 %v63, %v64
    %vm66 = vcmask 0
    %67 = vst.msk [vmem:[#allocation5] sm:$0x1] %vm66, %v65
    // Predicated region
    $region18: #{tpu_custom_call.1} parent=1 // pred_check
      _
    $region19: #{tpu_custom_call.1} parent=1 // pred_check_branch
      %69 = sbr.rel (0) target = $region21
    $region20: #{tpu_custom_call.1} parent=1 // pred_region
      %71 = vsyncadd [#allocation4], 0
      %s73 = sshll.u32 [#allocation5], 4
      %s74 = int_to_ptr.vmem [resolvable:$true] %s73
      %s75 = sshll.u32 %s3, 4
      %s76 = int_to_ptr.hbm [resolvable:$true] %s75
      %78 = dma.vmem_to_hbm [thread:$0]  %s74, 16, %s76, [#allocation4]
    $region21: #{tpu_custom_call.1} parent=1 // pred_fallthru
      _
    // Predicated region
    $region22: #{tpu_custom_call.1} parent=1 // pred_check
      _
    $region23: #{tpu_custom_call.1} parent=1 // pred_check_branch
      %80 = sbr.rel (0) target = $region25
    $region24: #{tpu_custom_call.1} parent=1 // pred_region
      %82 = dma.done [#allocation4], 16
    $region25: #{tpu_custom_call.1} parent=1 // pred_fallthru
      _
    %83 = vsyncpa [#allocation3], 1
    %84 = vsyncpa [#allocation4], 1

</llo_original>
